<compile_context>
chip_gen: v7x
topology: tpu7x:2x2x1
jax: 0.10.0
libtpu: 0.0.40
codegen_flags: <defaults>
</compile_context>

<pallas_src>
import jax
import jax.numpy as jnp
from jax.experimental import pallas as pl
from jax.experimental.pallas import tpu as pltpu


def vanilla_rnn_kernel(x_ref, whx_ref, whh_ref, wph_ref, bh_ref, bp_ref, out_ref):
    """Full RNN unroll over the sequence for one batch tile.

    x_ref   : (T, Bt, 1)   whx_ref : (1, H)   whh_ref : (H, H)
    wph_ref : (H, C)       bh_ref  : (1, H)   bp_ref  : (1, C)
    out_ref : (Bt, C)
    """
    seq_len = x_ref.shape[0]

    # Hoist weight/bias loads out of the (unrolled) recurrence.
    w_hx = whx_ref[...]            # (1, H)
    w_hh = whh_ref[...]            # (H, H)
    b_h = bh_ref[...]              # (1, H)

    # Precompute the input projection + hidden bias for every timestep in one
    # vectorized pass: (T, Bt, 1) * (1, 1, H) + (1, 1, H) -> (T, Bt, H).
    # This work is independent of the hidden state, so it stays off the serial
    # MXU -> add -> tanh critical path of the recurrence.
    inp_all = x_ref[...] * w_hx[None, :, :] + b_h[None, :, :]

    # h_0 = 0  =>  h_1 = tanh(x_0 W_hx + b_h); later steps add the recurrent matmul.
    h = jnp.tanh(inp_all[0])                               # (Bt, H)
    for t in range(1, seq_len):    # static trip count -> fully unrolled
        h = jnp.tanh(inp_all[t] +
                     jnp.dot(h, w_hh, preferred_element_type=jnp.float32))

    # logits = h @ W_ph + b_p   (lane-dense (Bt, C) store, no wrapper transpose)
    out_ref[...] = (jnp.dot(h, wph_ref[...], preferred_element_type=jnp.float32)
                    + bp_ref[...])


def vanilla_rnn_forward(x, W_hx, W_hh, W_ph, bias_h, bias_p, *, batch_tile=None):
    """x: (B, T) float32; returns logits (B, C). Requires input_dim == 1."""
    B, T = x.shape
    # TODO(synk): input_dim > 1 would need a real (Bt, I) @ (I, H) matmul per step;
    # the PyTorch forward's .view(-1, 1) pins input_dim == 1, so we assume it here.
    assert W_hx.shape[0] == 1, "PyTorch forward implies input_dim == 1"
    H = W_hh.shape[0]
    C = W_ph.shape[1]

    # Batch tile: full batch for small B; cap at 128 so large batches get a
    # "parallel" grid axis (sharded across TensorCores on v7x).
    bt = min(B, 128) if batch_tile is None else batch_tile
    assert B % bt == 0, "batch must be divisible by the batch tile"

    x_k = x.T.astype(jnp.float32)[:, :, None]       # (T, B, 1) time-major
    whx = W_hx.astype(jnp.float32)                  # (1, H)
    whh = W_hh.astype(jnp.float32)                  # (H, H)
    wph = W_ph.astype(jnp.float32)                  # (H, C)
    bh = bias_h.reshape(1, H).astype(jnp.float32)   # (1, H)
    bp = bias_p.reshape(1, C).astype(jnp.float32)   # (1, C)

    out = pl.pallas_call(
        vanilla_rnn_kernel,
        out_shape=jax.ShapeDtypeStruct((B, C), jnp.float32),
        grid=(B // bt,),
        in_specs=[
            pl.BlockSpec((T, bt, 1), lambda i: (0, i, 0)),   # x tile (time-major)
            pl.BlockSpec((1, H), lambda i: (0, 0)),          # W_hx
            pl.BlockSpec((H, H), lambda i: (0, 0)),          # W_hh
            pl.BlockSpec((H, C), lambda i: (0, 0)),          # W_ph
            pl.BlockSpec((1, H), lambda i: (0, 0)),          # b_h
            pl.BlockSpec((1, C), lambda i: (0, 0)),          # b_p
        ],
        out_specs=pl.BlockSpec((bt, C), lambda i: (i, 0)),
        compiler_params=pltpu.CompilerParams(
            dimension_semantics=("parallel",)),
    )(x_k, whx, whh, wph, bh, bp)

    return out                                       # (B, C)


def vanilla_rnn_reference(x, W_hx, W_hh, W_ph, bias_h, bias_p):
    """Pure-JAX mirror of the PyTorch forward for verification."""
    B, T = x.shape
    H = W_hh.shape[0]
    h_t = jnp.zeros((B, H), jnp.float32)
    for t in range(T):
        h_t = jnp.tanh(x[:, t].reshape(-1, 1) @ W_hx + h_t @ W_hh + bias_h)
    return h_t @ W_ph + bias_p


if __name__ == "__main__":
    # Shapes implied by the module (palindrome-style task): scalar input per step.
    seq_length = 8
    input_dim = 1
    num_hidden = 32
    num_classes = 10
    batch_size = 8

    key = jax.random.PRNGKey(0)
    kx, k1, k2, k3 = jax.random.split(key, 4)

    # Deterministic kaiming_normal_-style init (fan_in = size(1), gain = sqrt(2)).
    W_hx = jax.random.normal(k1, (input_dim, num_hidden), jnp.float32) * jnp.sqrt(2.0 / num_hidden)
    W_hh = jax.random.normal(k2, (num_hidden, num_hidden), jnp.float32) * jnp.sqrt(2.0 / num_hidden)
    W_ph = jax.random.normal(k3, (num_hidden, num_classes), jnp.float32) * jnp.sqrt(2.0 / num_classes)
    bias_h = jnp.zeros((num_hidden,), jnp.float32)
    bias_p = jnp.zeros((num_classes,), jnp.float32)

    x = jax.random.normal(kx, (batch_size, seq_length), jnp.float32)

    out = vanilla_rnn_forward(x, W_hx, W_hh, W_ph, bias_h, bias_p)
    out = jax.block_until_ready(out)

    ref = vanilla_rnn_reference(x, W_hx, W_hh, W_ph, bias_h, bias_p)
    assert out.shape == (batch_size, num_classes)
    assert jnp.allclose(out, ref, atol=1e-4, rtol=1e-4), "mismatch vs JAX reference"

    print("KERNEL_OK")
</pallas_src>

<mosaic_0001>
module attributes {stable_mosaic.version = 11 : i64} {
  func.func @vanilla_rnn_kernel(%arg0: i32, %arg1: memref<8x8x1xf32, #tpu.memory_space<vmem>>, %arg2: memref<1x32xf32, #tpu.memory_space<vmem>>, %arg3: memref<32x32xf32, #tpu.memory_space<vmem>>, %arg4: memref<32x10xf32, #tpu.memory_space<vmem>>, %arg5: memref<1x32xf32, #tpu.memory_space<vmem>>, %arg6: memref<1x10xf32, #tpu.memory_space<vmem>>, %arg7: memref<8x10xf32, #tpu.memory_space<vmem>>) attributes {dimension_semantics = [#tpu.dimension_semantics<parallel>], iteration_bounds = array<i64: 1>, scalar_prefetch = 0 : i64, scratch_operands = 0 : i64, tpu.core_type = #tpu.core_type<tc>, window_params = [{transform_indices = @transform_0, window_bounds = array<i64: 8, 8, 1>}, {pipeline_mode = #tpu.pipeline_mode<synchronous>, transform_indices = @transform_1, window_bounds = array<i64: 1, 32>}, {pipeline_mode = #tpu.pipeline_mode<synchronous>, transform_indices = @transform_2, window_bounds = array<i64: 32, 32>}, {pipeline_mode = #tpu.pipeline_mode<synchronous>, transform_indices = @transform_3, window_bounds = array<i64: 32, 10>}, {pipeline_mode = #tpu.pipeline_mode<synchronous>, transform_indices = @transform_4, window_bounds = array<i64: 1, 32>}, {pipeline_mode = #tpu.pipeline_mode<synchronous>, transform_indices = @transform_5, window_bounds = array<i64: 1, 10>}, {transform_indices = @transform_6, window_bounds = array<i64: 8, 10>}]} {
    %c0 = arith.constant 0 : index
    %c0_0 = arith.constant 0 : index
    %0 = vector.load %arg2[%c0, %c0_0] : memref<1x32xf32, #tpu.memory_space<vmem>>, vector<1x32xf32>
    %c0_1 = arith.constant 0 : index
    %c0_2 = arith.constant 0 : index
    %1 = vector.load %arg3[%c0_1, %c0_2] : memref<32x32xf32, #tpu.memory_space<vmem>>, vector<32x32xf32>
    %c0_3 = arith.constant 0 : index
    %c0_4 = arith.constant 0 : index
    %2 = vector.load %arg5[%c0_3, %c0_4] : memref<1x32xf32, #tpu.memory_space<vmem>>, vector<1x32xf32>
    %c0_5 = arith.constant 0 : index
    %c0_6 = arith.constant 0 : index
    %c0_7 = arith.constant 0 : index
    %3 = vector.load %arg1[%c0_5, %c0_6, %c0_7] : memref<8x8x1xf32, #tpu.memory_space<vmem>>, vector<8x8x1xf32>
    %4 = vector.shape_cast %0 : vector<1x32xf32> to vector<1x1x32xf32>
    %5 = vector.broadcast %3 : vector<8x8x1xf32> to vector<8x8x32xf32>
    %6 = vector.broadcast %4 : vector<1x1x32xf32> to vector<8x8x32xf32>
    %7 = arith.mulf %5, %6 : vector<8x8x32xf32>
    %8 = vector.shape_cast %2 : vector<1x32xf32> to vector<1x1x32xf32>
    %9 = vector.broadcast %8 : vector<1x1x32xf32> to vector<8x8x32xf32>
    %10 = arith.addf %7, %9 : vector<8x8x32xf32>
    %11 = vector.extract_strided_slice %10 {offsets = [0, 0, 0], sizes = [1, 8, 32], strides = [1, 1, 1]} : vector<8x8x32xf32> to vector<1x8x32xf32>
    %12 = vector.shape_cast %11 : vector<1x8x32xf32> to vector<8x32xf32>
    %13 = math.tanh %12 : vector<8x32xf32>
    %14 = vector.extract_strided_slice %10 {offsets = [1, 0, 0], sizes = [1, 8, 32], strides = [1, 1, 1]} : vector<8x8x32xf32> to vector<1x8x32xf32>
    %15 = vector.shape_cast %14 : vector<1x8x32xf32> to vector<8x32xf32>
    %cst = arith.constant dense<0.000000e+00> : vector<8x32xf32>
    %16 = tpu.matmul %13, %1, %cst {dimension_numbers = #tpu.dot_dimension_numbers<[1], [0], [0], [1], [0, 0, 1, 1], [], []>} : vector<8x32xf32>, vector<32x32xf32>, vector<8x32xf32> -> vector<8x32xf32>
    %17 = arith.addf %15, %16 : vector<8x32xf32>
    %18 = math.tanh %17 : vector<8x32xf32>
    %19 = vector.extract_strided_slice %10 {offsets = [2, 0, 0], sizes = [1, 8, 32], strides = [1, 1, 1]} : vector<8x8x32xf32> to vector<1x8x32xf32>
    %20 = vector.shape_cast %19 : vector<1x8x32xf32> to vector<8x32xf32>
    %cst_8 = arith.constant dense<0.000000e+00> : vector<8x32xf32>
    %21 = tpu.matmul %18, %1, %cst_8 {dimension_numbers = #tpu.dot_dimension_numbers<[1], [0], [0], [1], [0, 0, 1, 1], [], []>} : vector<8x32xf32>, vector<32x32xf32>, vector<8x32xf32> -> vector<8x32xf32>
    %22 = arith.addf %20, %21 : vector<8x32xf32>
    %23 = math.tanh %22 : vector<8x32xf32>
    %24 = vector.extract_strided_slice %10 {offsets = [3, 0, 0], sizes = [1, 8, 32], strides = [1, 1, 1]} : vector<8x8x32xf32> to vector<1x8x32xf32>
    %25 = vector.shape_cast %24 : vector<1x8x32xf32> to vector<8x32xf32>
    %cst_9 = arith.constant dense<0.000000e+00> : vector<8x32xf32>
    %26 = tpu.matmul %23, %1, %cst_9 {dimension_numbers = #tpu.dot_dimension_numbers<[1], [0], [0], [1], [0, 0, 1, 1], [], []>} : vector<8x32xf32>, vector<32x32xf32>, vector<8x32xf32> -> vector<8x32xf32>
    %27 = arith.addf %25, %26 : vector<8x32xf32>
    %28 = math.tanh %27 : vector<8x32xf32>
    %29 = vector.extract_strided_slice %10 {offsets = [4, 0, 0], sizes = [1, 8, 32], strides = [1, 1, 1]} : vector<8x8x32xf32> to vector<1x8x32xf32>
    %30 = vector.shape_cast %29 : vector<1x8x32xf32> to vector<8x32xf32>
    %cst_10 = arith.constant dense<0.000000e+00> : vector<8x32xf32>
    %31 = tpu.matmul %28, %1, %cst_10 {dimension_numbers = #tpu.dot_dimension_numbers<[1], [0], [0], [1], [0, 0, 1, 1], [], []>} : vector<8x32xf32>, vector<32x32xf32>, vector<8x32xf32> -> vector<8x32xf32>
    %32 = arith.addf %30, %31 : vector<8x32xf32>
    %33 = math.tanh %32 : vector<8x32xf32>
    %34 = vector.extract_strided_slice %10 {offsets = [5, 0, 0], sizes = [1, 8, 32], strides = [1, 1, 1]} : vector<8x8x32xf32> to vector<1x8x32xf32>
    %35 = vector.shape_cast %34 : vector<1x8x32xf32> to vector<8x32xf32>
    %cst_11 = arith.constant dense<0.000000e+00> : vector<8x32xf32>
    %36 = tpu.matmul %33, %1, %cst_11 {dimension_numbers = #tpu.dot_dimension_numbers<[1], [0], [0], [1], [0, 0, 1, 1], [], []>} : vector<8x32xf32>, vector<32x32xf32>, vector<8x32xf32> -> vector<8x32xf32>
    %37 = arith.addf %35, %36 : vector<8x32xf32>
    %38 = math.tanh %37 : vector<8x32xf32>
    %39 = vector.extract_strided_slice %10 {offsets = [6, 0, 0], sizes = [1, 8, 32], strides = [1, 1, 1]} : vector<8x8x32xf32> to vector<1x8x32xf32>
    %40 = vector.shape_cast %39 : vector<1x8x32xf32> to vector<8x32xf32>
    %cst_12 = arith.constant dense<0.000000e+00> : vector<8x32xf32>
    %41 = tpu.matmul %38, %1, %cst_12 {dimension_numbers = #tpu.dot_dimension_numbers<[1], [0], [0], [1], [0, 0, 1, 1], [], []>} : vector<8x32xf32>, vector<32x32xf32>, vector<8x32xf32> -> vector<8x32xf32>
    %42 = arith.addf %40, %41 : vector<8x32xf32>
    %43 = math.tanh %42 : vector<8x32xf32>
    %44 = vector.extract_strided_slice %10 {offsets = [7, 0, 0], sizes = [1, 8, 32], strides = [1, 1, 1]} : vector<8x8x32xf32> to vector<1x8x32xf32>
    %45 = vector.shape_cast %44 : vector<1x8x32xf32> to vector<8x32xf32>
    %cst_13 = arith.constant dense<0.000000e+00> : vector<8x32xf32>
    %46 = tpu.matmul %43, %1, %cst_13 {dimension_numbers = #tpu.dot_dimension_numbers<[1], [0], [0], [1], [0, 0, 1, 1], [], []>} : vector<8x32xf32>, vector<32x32xf32>, vector<8x32xf32> -> vector<8x32xf32>
    %47 = arith.addf %45, %46 : vector<8x32xf32>
    %48 = math.tanh %47 : vector<8x32xf32>
    %c0_14 = arith.constant 0 : index
    %c0_15 = arith.constant 0 : index
    %49 = vector.load %arg4[%c0_14, %c0_15] : memref<32x10xf32, #tpu.memory_space<vmem>>, vector<32x10xf32>
    %cst_16 = arith.constant dense<0.000000e+00> : vector<8x10xf32>
    %50 = tpu.matmul %48, %49, %cst_16 {dimension_numbers = #tpu.dot_dimension_numbers<[1], [0], [0], [1], [0, 0, 1, 1], [], []>} : vector<8x32xf32>, vector<32x10xf32>, vector<8x10xf32> -> vector<8x10xf32>
    %c0_17 = arith.constant 0 : index
    %c0_18 = arith.constant 0 : index
    %51 = vector.load %arg6[%c0_17, %c0_18] : memref<1x10xf32, #tpu.memory_space<vmem>>, vector<1x10xf32>
    %52 = vector.broadcast %51 : vector<1x10xf32> to vector<8x10xf32>
    %53 = arith.addf %50, %52 : vector<8x10xf32>
    %c0_19 = arith.constant 0 : index
    %c0_20 = arith.constant 0 : index
    %54 = vector.load %arg7[%c0_19, %c0_20] : memref<8x10xf32, #tpu.memory_space<vmem>>, vector<8x10xf32>
    tpu.vector_store %arg7[%c0_19, %c0_20], %53 {strides = array<i32>} : memref<8x10xf32, #tpu.memory_space<vmem>>, vector<8x10xf32>,
    return
  }
  func.func @transform_0(%arg0: i32) -> (i32, i32, i32) {
    %c0_i32 = arith.constant 0 : i32
    %c0_i32_0 = arith.constant 0 : i32
    %c0_i32_1 = arith.constant 0 : i32
    return %c0_i32, %arg0, %c0_i32_0 : i32, i32, i32
  }
  func.func @transform_1(%arg0: i32) -> (i32, i32) {
    %c0_i32 = arith.constant 0 : i32
    %c0_i32_0 = arith.constant 0 : i32
    %c0_i32_1 = arith.constant 0 : i32
    return %c0_i32, %c0_i32_0 : i32, i32
  }
  func.func @transform_2(%arg0: i32) -> (i32, i32) {
    %c0_i32 = arith.constant 0 : i32
    %c0_i32_0 = arith.constant 0 : i32
    %c0_i32_1 = arith.constant 0 : i32
    return %c0_i32, %c0_i32_0 : i32, i32
  }
  func.func @transform_3(%arg0: i32) -> (i32, i32) {
    %c0_i32 = arith.constant 0 : i32
    %c0_i32_0 = arith.constant 0 : i32
    %c0_i32_1 = arith.constant 0 : i32
    return %c0_i32, %c0_i32_0 : i32, i32
  }
  func.func @transform_4(%arg0: i32) -> (i32, i32) {
    %c0_i32 = arith.constant 0 : i32
    %c0_i32_0 = arith.constant 0 : i32
    %c0_i32_1 = arith.constant 0 : i32
    return %c0_i32, %c0_i32_0 : i32, i32
  }
  func.func @transform_5(%arg0: i32) -> (i32, i32) {
    %c0_i32 = arith.constant 0 : i32
    %c0_i32_0 = arith.constant 0 : i32
    %c0_i32_1 = arith.constant 0 : i32
    return %c0_i32, %c0_i32_0 : i32, i32
  }
  func.func @transform_6(%arg0: i32) -> (i32, i32) {
    %c0_i32 = arith.constant 0 : i32
    %c0_i32_0 = arith.constant 0 : i32
    return %arg0, %c0_i32 : i32, i32
  }
}

</mosaic_0001>

<llo_original>
// kernel: tpu_custom_call.1
$region0: #{tpu_custom_call.1}
  #allocation0 [shape = 'u32[]', space=smem, size = 0x4, offset = 0x4, fixed_abs, tag = 'smem constant byte address 0x4 - core index']
  #allocation1 [shape = 'u32[144,128]{1,0:T(1,128)}', space=vmem, size = 0x12000, scoped, tag = 'internal scratch']
  %s0 = inlined_call_operand.vmem [shape: f32[8,8,1], index: 0, kind: input, shape index: {}]
  %s1 = inlined_call_operand.vmem [shape: f32[1,32], index: 1, kind: input, shape index: {}]
  %s2 = inlined_call_operand.vmem [shape: f32[32,32], index: 2, kind: input, shape index: {}]
  %s3 = inlined_call_operand.vmem [shape: f32[32,10], index: 3, kind: input, shape index: {}]
  %s4 = inlined_call_operand.vmem [shape: f32[1,32], index: 4, kind: input, shape index: {}]
  %s5 = inlined_call_operand.vmem [shape: f32[1,10], index: 5, kind: input, shape index: {}]
  %s6 = inlined_call_operand.hbm [shape: f32[8,10], index: 6, kind: output, shape index: {}]
  %s7 = sld [smem:[#allocation0]]
  $region34: #{tpu_custom_call.1} parent=0
    _
  %s9 = ssub.s32 1, %s7
  %s10 = scalar_select 0, %s9, %s7
  $region1: #{tpu_custom_call.1} parent=0
    #allocation2 [shape = 'u8[4096]{0}', space=vmem, size = 0x1000, scoped, tag = 'output window, operand 0, single buffered']
    #allocation3 [shape = 's32[1]{0}', space=sflag, size = 0x4, scoped, tag = 'scoped memory for tpu_custom_call.1']
    %11 = vsyncpa [#allocation3], 0
    // Predicated region
    $region2: #{tpu_custom_call.1} parent=1 // pred_check
      _
    $region3: #{tpu_custom_call.1} parent=1 // pred_check_branch
      %13 = sbr.rel (0) target = $region5
    $region4: #{tpu_custom_call.1} parent=1 // pred_region
      _
    $region5: #{tpu_custom_call.1} parent=1 // pred_fallthru
      _
    // Predicated region
    $region6: #{tpu_custom_call.1} parent=1 // pred_check
      _
    $region7: #{tpu_custom_call.1} parent=1 // pred_check_branch
      %15 = sbr.rel (0) target = $region9
    $region8: #{tpu_custom_call.1} parent=1 // pred_region
      _
    $region9: #{tpu_custom_call.1} parent=1 // pred_fallthru
      _
    // Predicated region
    $region10: #{tpu_custom_call.1} parent=1 // pred_check
      _
    $region11: #{tpu_custom_call.1} parent=1 // pred_check_branch
      %17 = sbr.rel (0) target = $region13
    $region12: #{tpu_custom_call.1} parent=1 // pred_region
      _
    $region13: #{tpu_custom_call.1} parent=1 // pred_fallthru
      _
    // Predicated region
    $region14: #{tpu_custom_call.1} parent=1 // pred_check
      _
    $region15: #{tpu_custom_call.1} parent=1 // pred_check_branch
      %19 = sbr.rel (0) target = $region17
    $region16: #{tpu_custom_call.1} parent=1 // pred_region
      _
    $region17: #{tpu_custom_call.1} parent=1 // pred_fallthru
      _
    // Predicated region
    $region18: #{tpu_custom_call.1} parent=1 // pred_check
      _
    $region19: #{tpu_custom_call.1} parent=1 // pred_check_branch
      %21 = sbr.rel (0) target = $region21
    $region20: #{tpu_custom_call.1} parent=1 // pred_region
      _
    $region21: #{tpu_custom_call.1} parent=1 // pred_fallthru
      _
    // Predicated region
    $region22: #{tpu_custom_call.1} parent=1 // pred_check
      _
    $region23: #{tpu_custom_call.1} parent=1 // pred_check_branch
      %23 = sbr.rel (0) target = $region25
    $region24: #{tpu_custom_call.1} parent=1 // pred_region
      _
    $region25: #{tpu_custom_call.1} parent=1 // pred_fallthru
      _
    %v24 = vld [vmem:[%s1] sm:$0x1]
    %v25 = vld [vmem:[%s2] sm:$0xff]
    %v26 = vld [vmem:[%s2 + $0x8] sm:$0xff]
    %v27 = vld [vmem:[%s2 + $0x10] sm:$0xff]
    %v28 = vld [vmem:[%s2 + $0x18] sm:$0xff]
    %v29 = vld [vmem:[%s4] sm:$0x1]
    %v30 = vld [vmem:[%s0] sm:$0xff]
    %v31 = vld [vmem:[%s0 + $0x8] sm:$0xff]
    %v32 = vld [vmem:[%s0 + $0x10] sm:$0xff]
    %v33 = vld [vmem:[%s0 + $0x18] sm:$0xff]
    %v34 = vld [vmem:[%s0 + $0x20] sm:$0xff]
    %v35 = vld [vmem:[%s0 + $0x28] sm:$0xff]
    %v36 = vld [vmem:[%s0 + $0x30] sm:$0xff]
    %v37 = vld [vmem:[%s0 + $0x38] sm:$0xff]
    %39 = vset.pattern.permute.xlu0 0
    %40 = vperm.xlu0 %39, %v30
    %v41 = vpop.permute.xlu0 %40
    %44 = vset.pattern.permute.xlu0 0
    %45 = vperm.xlu0 %44, %v31
    %v46 = vpop.permute.xlu0 %45
    %49 = vset.pattern.permute.xlu0 0
    %50 = vperm.xlu0 %49, %v32
    %v51 = vpop.permute.xlu0 %50
    %54 = vset.pattern.permute.xlu0 0
    %55 = vperm.xlu0 %54, %v33
    %v56 = vpop.permute.xlu0 %55
    %59 = vset.pattern.permute.xlu0 0
    %60 = vperm.xlu0 %59, %v34
    %v61 = vpop.permute.xlu0 %60
    %64 = vset.pattern.permute.xlu0 0
    %65 = vperm.xlu0 %64, %v35
    %v66 = vpop.permute.xlu0 %65
    %69 = vset.pattern.permute.xlu0 0
    %70 = vperm.xlu0 %69, %v36
    %v71 = vpop.permute.xlu0 %70
    %74 = vset.pattern.permute.xlu0 0
    %75 = vperm.xlu0 %74, %v37
    %v76 = vpop.permute.xlu0 %75
    %v79 = vlaneseq
    %v80 = vshrl.u32 %v79, 7
    %v81 = vsub.s32 0, %v80
    %v82 = vrot.slane %v24, %v81
    %v84 = vmul.f32 %v41, %v82
    %v85 = vmul.f32 %v46, %v82
    %v86 = vmul.f32 %v51, %v82
    %v87 = vmul.f32 %v56, %v82
    %v88 = vmul.f32 %v61, %v82
    %v89 = vmul.f32 %v66, %v82
    %v90 = vmul.f32 %v71, %v82
    %v91 = vmul.f32 %v76, %v82
    %v93 = vlaneseq
    %v94 = vshrl.u32 %v93, 7
    %v95 = vsub.s32 0, %v94
    %v96 = vrot.slane %v29, %v95
    %v98 = vadd.f32 %v84, %v96
    %v99 = vadd.f32 %v85, %v96
    %v100 = vadd.f32 %v86, %v96
    %v101 = vadd.f32 %v87, %v96
    %v102 = vadd.f32 %v88, %v96
    %v103 = vadd.f32 %v89, %v96
    %v104 = vadd.f32 %v90, %v96
    %v105 = vadd.f32 %v91, %v96
    %v106 = vtanh.pop %v98
    %vm107 = vcmask 261120
    %v109 = vsel %vm107, %v106, 0
    %111 = vmatprep.subr.mxu0 0.0
    %112 = vmatpush1.msra.mxu0 %v25
    %113 = vmatprep.subr.mxu0 0.0
    %114 = vmatpush1.msra.mxu0 %v26
    %115 = vmatprep.subr.mxu0 0.0
    %116 = vmatpush1.msra.mxu0 %v27
    %117 = vmatprep.subr.mxu0 0.0
    %118 = vmatpush1.msra.mxu0 %v28
    %119 = vmatprep.subr.mxu0 0.0
    %120 = vmatpush1.msra.mxu0 0.0
    %121 = vmatprep.subr.mxu0 0.0
    %122 = vmatpush1.msra.mxu0 0.0
    %123 = vmatprep.subr.mxu0 0.0
    %124 = vmatpush1.msra.mxu0 0.0
    %125 = vmatprep.subr.mxu0 0.0
    %126 = vmatpush1.msra.mxu0 0.0
    %127 = vmatprep.subr.mxu0 0.0
    %128 = vmatpush1.msra.mxu0 0.0
    %129 = vmatprep.subr.mxu0 0.0
    %130 = vmatpush1.msra.mxu0 0.0
    %131 = vmatprep.subr.mxu0 0.0
    %132 = vmatpush1.msra.mxu0 0.0
    %133 = vmatprep.subr.mxu0 0.0
    %134 = vmatpush1.msra.mxu0 0.0
    %135 = vmatprep.subr.mxu0 0.0
    %136 = vmatpush1.msra.mxu0 0.0
    %137 = vmatprep.subr.mxu0 0.0
    %138 = vmatpush1.msra.mxu0 0.0
    %139 = vmatprep.subr.mxu0 0.0
    %140 = vmatpush1.msra.mxu0 0.0
    %141 = vmatprep.subr.mxu0 0.0
    %142 = vmatpush1.msra.mxu0 0.0
    %143 = vmatprep.subr.mxu0 0.0
    %144 = vmatpush1.msra.mxu0 0.0
    %145 = vmatprep.subr.mxu0 0.0
    %146 = vmatpush1.msra.mxu0 0.0
    %147 = vmatprep.subr.mxu0 0.0
    %148 = vmatpush1.msra.mxu0 0.0
    %149 = vmatprep.subr.mxu0 0.0
    %150 = vmatpush1.msra.mxu0 0.0
    %151 = vmatprep.subr.mxu0 0.0
    %152 = vmatpush1.msra.mxu0 0.0
    %153 = vmatprep.subr.mxu0 0.0
    %154 = vmatpush1.msra.mxu0 0.0
    %155 = vmatprep.subr.mxu0 0.0
    %156 = vmatpush1.msra.mxu0 0.0
    %157 = vmatprep.subr.mxu0 0.0
    %158 = vmatpush1.msra.mxu0 0.0
    %159 = vmatprep.subr.mxu0 0.0
    %160 = vmatpush1.msra.mxu0 0.0
    %161 = vmatprep.subr.mxu0 0.0
    %162 = vmatpush1.msra.mxu0 0.0
    %163 = vmatprep.subr.mxu0 0.0
    %164 = vmatpush1.msra.mxu0 0.0
    %165 = vmatprep.subr.mxu0 0.0
    %166 = vmatpush1.msra.mxu0 0.0
    %167 = vmatprep.subr.mxu0 0.0
    %168 = vmatpush1.msra.mxu0 0.0
    %169 = vmatprep.subr.mxu0 0.0
    %170 = vmatpush1.msra.mxu0 0.0
    %171 = vmatprep.subr.mxu0 0.0
    %172 = vmatpush1.msra.mxu0 0.0
    %173 = vmatprep.subr.mxu0 0.0
    %174 = vmatpush1.msra.mxu0 0.0
    %175 = vmatprep.mubr.f32.mxu0 0.0
    %176 = vmatmul.mubr.f32.gmra.mrb[0].mxu0 %v109
    %v177 = vpop.f32.mrb[0].mxu0
    %v178 = vadd.f32 0.0, %v177
    %v179 = vpop.f32.mrb[0].mxu0
    %180 = vdwg.mxu0
    %v181 = vadd.f32 %v99, %v178
    %v182 = vtanh.pop %v181
    %v184 = vsel %vm107, %v182, 0
    %186 = vmatprep.subr.mxu0 0.0
    %187 = vmatpush1.msra.mxu0 %v25
    %188 = vmatprep.subr.mxu0 0.0
    %189 = vmatpush1.msra.mxu0 %v26
    %190 = vmatprep.subr.mxu0 0.0
    %191 = vmatpush1.msra.mxu0 %v27
    %192 = vmatprep.subr.mxu0 0.0
    %193 = vmatpush1.msra.mxu0 %v28
    %194 = vmatprep.subr.mxu0 0.0
    %195 = vmatpush1.msra.mxu0 0.0
    %196 = vmatprep.subr.mxu0 0.0
    %197 = vmatpush1.msra.mxu0 0.0
    %198 = vmatprep.subr.mxu0 0.0
    %199 = vmatpush1.msra.mxu0 0.0
    %200 = vmatprep.subr.mxu0 0.0
    %201 = vmatpush1.msra.mxu0 0.0
    %202 = vmatprep.subr.mxu0 0.0
    %203 = vmatpush1.msra.mxu0 0.0
    %204 = vmatprep.subr.mxu0 0.0
    %205 = vmatpush1.msra.mxu0 0.0
    %206 = vmatprep.subr.mxu0 0.0
    %207 = vmatpush1.msra.mxu0 0.0
    %208 = vmatprep.subr.mxu0 0.0
    %209 = vmatpush1.msra.mxu0 0.0
    %210 = vmatprep.subr.mxu0 0.0
    %211 = vmatpush1.msra.mxu0 0.0
    %212 = vmatprep.subr.mxu0 0.0
    %213 = vmatpush1.msra.mxu0 0.0
    %214 = vmatprep.subr.mxu0 0.0
    %215 = vmatpush1.msra.mxu0 0.0
    %216 = vmatprep.subr.mxu0 0.0
    %217 = vmatpush1.msra.mxu0 0.0
    %218 = vmatprep.subr.mxu0 0.0
    %219 = vmatpush1.msra.mxu0 0.0
    %220 = vmatprep.subr.mxu0 0.0
    %221 = vmatpush1.msra.mxu0 0.0
    %222 = vmatprep.subr.mxu0 0.0
    %223 = vmatpush1.msra.mxu0 0.0
    %224 = vmatprep.subr.mxu0 0.0
    %225 = vmatpush1.msra.mxu0 0.0
    %226 = vmatprep.subr.mxu0 0.0
    %227 = vmatpush1.msra.mxu0 0.0
    %228 = vmatprep.subr.mxu0 0.0
    %229 = vmatpush1.msra.mxu0 0.0
    %230 = vmatprep.subr.mxu0 0.0
    %231 = vmatpush1.msra.mxu0 0.0
    %232 = vmatprep.subr.mxu0 0.0
    %233 = vmatpush1.msra.mxu0 0.0
    %234 = vmatprep.subr.mxu0 0.0
    %235 = vmatpush1.msra.mxu0 0.0
    %236 = vmatprep.subr.mxu0 0.0
    %237 = vmatpush1.msra.mxu0 0.0
    %238 = vmatprep.subr.mxu0 0.0
    %239 = vmatpush1.msra.mxu0 0.0
    %240 = vmatprep.subr.mxu0 0.0
    %241 = vmatpush1.msra.mxu0 0.0
    %242 = vmatprep.subr.mxu0 0.0
    %243 = vmatpush1.msra.mxu0 0.0
    %244 = vmatprep.subr.mxu0 0.0
    %245 = vmatpush1.msra.mxu0 0.0
    %246 = vmatprep.subr.mxu0 0.0
    %247 = vmatpush1.msra.mxu0 0.0
    %248 = vmatprep.subr.mxu0 0.0
    %249 = vmatpush1.msra.mxu0 0.0
    %250 = vmatprep.mubr.f32.mxu0 0.0
    %251 = vmatmul.mubr.f32.gmra.mrb[0].mxu0 %v184
    %v252 = vpop.f32.mrb[0].mxu0
    %v253 = vadd.f32 0.0, %v252
    %v254 = vpop.f32.mrb[0].mxu0
    %255 = vdwg.mxu0
    %v256 = vadd.f32 %v100, %v253
    %v257 = vtanh.pop %v256
    %v259 = vsel %vm107, %v257, 0
    %261 = vmatprep.subr.mxu0 0.0
    %262 = vmatpush1.msra.mxu0 %v25
    %263 = vmatprep.subr.mxu0 0.0
    %264 = vmatpush1.msra.mxu0 %v26
    %265 = vmatprep.subr.mxu0 0.0
    %266 = vmatpush1.msra.mxu0 %v27
    %267 = vmatprep.subr.mxu0 0.0
    %268 = vmatpush1.msra.mxu0 %v28
    %269 = vmatprep.subr.mxu0 0.0
    %270 = vmatpush1.msra.mxu0 0.0
    %271 = vmatprep.subr.mxu0 0.0
    %272 = vmatpush1.msra.mxu0 0.0
    %273 = vmatprep.subr.mxu0 0.0
    %274 = vmatpush1.msra.mxu0 0.0
    %275 = vmatprep.subr.mxu0 0.0
    %276 = vmatpush1.msra.mxu0 0.0
    %277 = vmatprep.subr.mxu0 0.0
    %278 = vmatpush1.msra.mxu0 0.0
    %279 = vmatprep.subr.mxu0 0.0
    %280 = vmatpush1.msra.mxu0 0.0
    %281 = vmatprep.subr.mxu0 0.0
    %282 = vmatpush1.msra.mxu0 0.0
    %283 = vmatprep.subr.mxu0 0.0
    %284 = vmatpush1.msra.mxu0 0.0
    %285 = vmatprep.subr.mxu0 0.0
    %286 = vmatpush1.msra.mxu0 0.0
    %287 = vmatprep.subr.mxu0 0.0
    %288 = vmatpush1.msra.mxu0 0.0
    %289 = vmatprep.subr.mxu0 0.0
    %290 = vmatpush1.msra.mxu0 0.0
    %291 = vmatprep.subr.mxu0 0.0
    %292 = vmatpush1.msra.mxu0 0.0
    %293 = vmatprep.subr.mxu0 0.0
    %294 = vmatpush1.msra.mxu0 0.0
    %295 = vmatprep.subr.mxu0 0.0
    %296 = vmatpush1.msra.mxu0 0.0
    %297 = vmatprep.subr.mxu0 0.0
    %298 = vmatpush1.msra.mxu0 0.0
    %299 = vmatprep.subr.mxu0 0.0
    %300 = vmatpush1.msra.mxu0 0.0
    %301 = vmatprep.subr.mxu0 0.0
    %302 = vmatpush1.msra.mxu0 0.0
    %303 = vmatprep.subr.mxu0 0.0
    %304 = vmatpush1.msra.mxu0 0.0
    %305 = vmatprep.subr.mxu0 0.0
    %306 = vmatpush1.msra.mxu0 0.0
    %307 = vmatprep.subr.mxu0 0.0
    %308 = vmatpush1.msra.mxu0 0.0
    %309 = vmatprep.subr.mxu0 0.0
    %310 = vmatpush1.msra.mxu0 0.0
    %311 = vmatprep.subr.mxu0 0.0
    %312 = vmatpush1.msra.mxu0 0.0
    %313 = vmatprep.subr.mxu0 0.0
    %314 = vmatpush1.msra.mxu0 0.0
    %315 = vmatprep.subr.mxu0 0.0
    %316 = vmatpush1.msra.mxu0 0.0
    %317 = vmatprep.subr.mxu0 0.0
    %318 = vmatpush1.msra.mxu0 0.0
    %319 = vmatprep.subr.mxu0 0.0
    %320 = vmatpush1.msra.mxu0 0.0
    %321 = vmatprep.subr.mxu0 0.0
    %322 = vmatpush1.msra.mxu0 0.0
    %323 = vmatprep.subr.mxu0 0.0
    %324 = vmatpush1.msra.mxu0 0.0
    %325 = vmatprep.mubr.f32.mxu0 0.0
    %326 = vmatmul.mubr.f32.gmra.mrb[0].mxu0 %v259
    %v327 = vpop.f32.mrb[0].mxu0
    %v328 = vadd.f32 0.0, %v327
    %v329 = vpop.f32.mrb[0].mxu0
    %330 = vdwg.mxu0
    %v331 = vadd.f32 %v101, %v328
    %v332 = vtanh.pop %v331
    %v334 = vsel %vm107, %v332, 0
    %336 = vmatprep.subr.mxu0 0.0
    %337 = vmatpush1.msra.mxu0 %v25
    %338 = vmatprep.subr.mxu0 0.0
    %339 = vmatpush1.msra.mxu0 %v26
    %340 = vmatprep.subr.mxu0 0.0
    %341 = vmatpush1.msra.mxu0 %v27
    %342 = vmatprep.subr.mxu0 0.0
    %343 = vmatpush1.msra.mxu0 %v28
    %344 = vmatprep.subr.mxu0 0.0
    %345 = vmatpush1.msra.mxu0 0.0
    %346 = vmatprep.subr.mxu0 0.0
    %347 = vmatpush1.msra.mxu0 0.0
    %348 = vmatprep.subr.mxu0 0.0
    %349 = vmatpush1.msra.mxu0 0.0
    %350 = vmatprep.subr.mxu0 0.0
    %351 = vmatpush1.msra.mxu0 0.0
    %352 = vmatprep.subr.mxu0 0.0
    %353 = vmatpush1.msra.mxu0 0.0
    %354 = vmatprep.subr.mxu0 0.0
    %355 = vmatpush1.msra.mxu0 0.0
    %356 = vmatprep.subr.mxu0 0.0
    %357 = vmatpush1.msra.mxu0 0.0
    %358 = vmatprep.subr.mxu0 0.0
    %359 = vmatpush1.msra.mxu0 0.0
    %360 = vmatprep.subr.mxu0 0.0
    %361 = vmatpush1.msra.mxu0 0.0
    %362 = vmatprep.subr.mxu0 0.0
    %363 = vmatpush1.msra.mxu0 0.0
    %364 = vmatprep.subr.mxu0 0.0
    %365 = vmatpush1.msra.mxu0 0.0
    %366 = vmatprep.subr.mxu0 0.0
    %367 = vmatpush1.msra.mxu0 0.0
    %368 = vmatprep.subr.mxu0 0.0
    %369 = vmatpush1.msra.mxu0 0.0
    %370 = vmatprep.subr.mxu0 0.0
    %371 = vmatpush1.msra.mxu0 0.0
    %372 = vmatprep.subr.mxu0 0.0
    %373 = vmatpush1.msra.mxu0 0.0
    %374 = vmatprep.subr.mxu0 0.0
    %375 = vmatpush1.msra.mxu0 0.0
    %376 = vmatprep.subr.mxu0 0.0
    %377 = vmatpush1.msra.mxu0 0.0
    %378 = vmatprep.subr.mxu0 0.0
    %379 = vmatpush1.msra.mxu0 0.0
    %380 = vmatprep.subr.mxu0 0.0
    %381 = vmatpush1.msra.mxu0 0.0
    %382 = vmatprep.subr.mxu0 0.0
    %383 = vmatpush1.msra.mxu0 0.0
    %384 = vmatprep.subr.mxu0 0.0
    %385 = vmatpush1.msra.mxu0 0.0
    %386 = vmatprep.subr.mxu0 0.0
    %387 = vmatpush1.msra.mxu0 0.0
    %388 = vmatprep.subr.mxu0 0.0
    %389 = vmatpush1.msra.mxu0 0.0
    %390 = vmatprep.subr.mxu0 0.0
    %391 = vmatpush1.msra.mxu0 0.0
    %392 = vmatprep.subr.mxu0 0.0
    %393 = vmatpush1.msra.mxu0 0.0
    %394 = vmatprep.subr.mxu0 0.0
    %395 = vmatpush1.msra.mxu0 0.0
    %396 = vmatprep.subr.mxu0 0.0
    %397 = vmatpush1.msra.mxu0 0.0
    %398 = vmatprep.subr.mxu0 0.0
    %399 = vmatpush1.msra.mxu0 0.0
    %400 = vmatprep.mubr.f32.mxu0 0.0
    %401 = vmatmul.mubr.f32.gmra.mrb[0].mxu0 %v334
    %v402 = vpop.f32.mrb[0].mxu0
    %v403 = vadd.f32 0.0, %v402
    %v404 = vpop.f32.mrb[0].mxu0
    %405 = vdwg.mxu0
    %v406 = vadd.f32 %v102, %v403
    %v407 = vtanh.pop %v406
    %v409 = vsel %vm107, %v407, 0
    %411 = vmatprep.subr.mxu0 0.0
    %412 = vmatpush1.msra.mxu0 %v25
    %413 = vmatprep.subr.mxu0 0.0
    %414 = vmatpush1.msra.mxu0 %v26
    %415 = vmatprep.subr.mxu0 0.0
    %416 = vmatpush1.msra.mxu0 %v27
    %417 = vmatprep.subr.mxu0 0.0
    %418 = vmatpush1.msra.mxu0 %v28
    %419 = vmatprep.subr.mxu0 0.0
    %420 = vmatpush1.msra.mxu0 0.0
    %421 = vmatprep.subr.mxu0 0.0
    %422 = vmatpush1.msra.mxu0 0.0
    %423 = vmatprep.subr.mxu0 0.0
    %424 = vmatpush1.msra.mxu0 0.0
    %425 = vmatprep.subr.mxu0 0.0
    %426 = vmatpush1.msra.mxu0 0.0
    %427 = vmatprep.subr.mxu0 0.0
    %428 = vmatpush1.msra.mxu0 0.0
    %429 = vmatprep.subr.mxu0 0.0
    %430 = vmatpush1.msra.mxu0 0.0
    %431 = vmatprep.subr.mxu0 0.0
    %432 = vmatpush1.msra.mxu0 0.0
    %433 = vmatprep.subr.mxu0 0.0
    %434 = vmatpush1.msra.mxu0 0.0
    %435 = vmatprep.subr.mxu0 0.0
    %436 = vmatpush1.msra.mxu0 0.0
    %437 = vmatprep.subr.mxu0 0.0
    %438 = vmatpush1.msra.mxu0 0.0
    %439 = vmatprep.subr.mxu0 0.0
    %440 = vmatpush1.msra.mxu0 0.0
    %441 = vmatprep.subr.mxu0 0.0
    %442 = vmatpush1.msra.mxu0 0.0
    %443 = vmatprep.subr.mxu0 0.0
    %444 = vmatpush1.msra.mxu0 0.0
    %445 = vmatprep.subr.mxu0 0.0
    %446 = vmatpush1.msra.mxu0 0.0
    %447 = vmatprep.subr.mxu0 0.0
    %448 = vmatpush1.msra.mxu0 0.0
    %449 = vmatprep.subr.mxu0 0.0
    %450 = vmatpush1.msra.mxu0 0.0
    %451 = vmatprep.subr.mxu0 0.0
    %452 = vmatpush1.msra.mxu0 0.0
    %453 = vmatprep.subr.mxu0 0.0
    %454 = vmatpush1.msra.mxu0 0.0
    %455 = vmatprep.subr.mxu0 0.0
    %456 = vmatpush1.msra.mxu0 0.0
    %457 = vmatprep.subr.mxu0 0.0
    %458 = vmatpush1.msra.mxu0 0.0
    %459 = vmatprep.subr.mxu0 0.0
    %460 = vmatpush1.msra.mxu0 0.0
    %461 = vmatprep.subr.mxu0 0.0
    %462 = vmatpush1.msra.mxu0 0.0
    %463 = vmatprep.subr.mxu0 0.0
    %464 = vmatpush1.msra.mxu0 0.0
    %465 = vmatprep.subr.mxu0 0.0
    %466 = vmatpush1.msra.mxu0 0.0
    %467 = vmatprep.subr.mxu0 0.0
    %468 = vmatpush1.msra.mxu0 0.0
    %469 = vmatprep.subr.mxu0 0.0
    %470 = vmatpush1.msra.mxu0 0.0
    %471 = vmatprep.subr.mxu0 0.0
    %472 = vmatpush1.msra.mxu0 0.0
    %473 = vmatprep.subr.mxu0 0.0
    %474 = vmatpush1.msra.mxu0 0.0
    %475 = vmatprep.mubr.f32.mxu0 0.0
    %476 = vmatmul.mubr.f32.gmra.mrb[0].mxu0 %v409
    %v477 = vpop.f32.mrb[0].mxu0
    %v478 = vadd.f32 0.0, %v477
    %v479 = vpop.f32.mrb[0].mxu0
    %480 = vdwg.mxu0
    %v481 = vadd.f32 %v103, %v478
    %v482 = vtanh.pop %v481
    %v484 = vsel %vm107, %v482, 0
    %486 = vmatprep.subr.mxu0 0.0
    %487 = vmatpush1.msra.mxu0 %v25
    %488 = vmatprep.subr.mxu0 0.0
    %489 = vmatpush1.msra.mxu0 %v26
    %490 = vmatprep.subr.mxu0 0.0
    %491 = vmatpush1.msra.mxu0 %v27
    %492 = vmatprep.subr.mxu0 0.0
    %493 = vmatpush1.msra.mxu0 %v28
    %494 = vmatprep.subr.mxu0 0.0
    %495 = vmatpush1.msra.mxu0 0.0
    %496 = vmatprep.subr.mxu0 0.0
    %497 = vmatpush1.msra.mxu0 0.0
    %498 = vmatprep.subr.mxu0 0.0
    %499 = vmatpush1.msra.mxu0 0.0
    %500 = vmatprep.subr.mxu0 0.0
    %501 = vmatpush1.msra.mxu0 0.0
    %502 = vmatprep.subr.mxu0 0.0
    %503 = vmatpush1.msra.mxu0 0.0
    %504 = vmatprep.subr.mxu0 0.0
    %505 = vmatpush1.msra.mxu0 0.0
    %506 = vmatprep.subr.mxu0 0.0
    %507 = vmatpush1.msra.mxu0 0.0
    %508 = vmatprep.subr.mxu0 0.0
    %509 = vmatpush1.msra.mxu0 0.0
    %510 = vmatprep.subr.mxu0 0.0
    %511 = vmatpush1.msra.mxu0 0.0
    %512 = vmatprep.subr.mxu0 0.0
    %513 = vmatpush1.msra.mxu0 0.0
    %514 = vmatprep.subr.mxu0 0.0
    %515 = vmatpush1.msra.mxu0 0.0
    %516 = vmatprep.subr.mxu0 0.0
    %517 = vmatpush1.msra.mxu0 0.0
    %518 = vmatprep.subr.mxu0 0.0
    %519 = vmatpush1.msra.mxu0 0.0
    %520 = vmatprep.subr.mxu0 0.0
    %521 = vmatpush1.msra.mxu0 0.0
    %522 = vmatprep.subr.mxu0 0.0
    %523 = vmatpush1.msra.mxu0 0.0
    %524 = vmatprep.subr.mxu0 0.0
    %525 = vmatpush1.msra.mxu0 0.0
    %526 = vmatprep.subr.mxu0 0.0
    %527 = vmatpush1.msra.mxu0 0.0
    %528 = vmatprep.subr.mxu0 0.0
    %529 = vmatpush1.msra.mxu0 0.0
    %530 = vmatprep.subr.mxu0 0.0
    %531 = vmatpush1.msra.mxu0 0.0
    %532 = vmatprep.subr.mxu0 0.0
    %533 = vmatpush1.msra.mxu0 0.0
    %534 = vmatprep.subr.mxu0 0.0
    %535 = vmatpush1.msra.mxu0 0.0
    %536 = vmatprep.subr.mxu0 0.0
    %537 = vmatpush1.msra.mxu0 0.0
    %538 = vmatprep.subr.mxu0 0.0
    %539 = vmatpush1.msra.mxu0 0.0
    %540 = vmatprep.subr.mxu0 0.0
    %541 = vmatpush1.msra.mxu0 0.0
    %542 = vmatprep.subr.mxu0 0.0
    %543 = vmatpush1.msra.mxu0 0.0
    %544 = vmatprep.subr.mxu0 0.0
    %545 = vmatpush1.msra.mxu0 0.0
    %546 = vmatprep.subr.mxu0 0.0
    %547 = vmatpush1.msra.mxu0 0.0
    %548 = vmatprep.subr.mxu0 0.0
    %549 = vmatpush1.msra.mxu0 0.0
    %550 = vmatprep.mubr.f32.mxu0 0.0
    %551 = vmatmul.mubr.f32.gmra.mrb[0].mxu0 %v484
    %v552 = vpop.f32.mrb[0].mxu0
    %v553 = vadd.f32 0.0, %v552
    %v554 = vpop.f32.mrb[0].mxu0
    %555 = vdwg.mxu0
    %v556 = vadd.f32 %v104, %v553
    %v557 = vtanh.pop %v556
    %v559 = vsel %vm107, %v557, 0
    %561 = vmatprep.subr.mxu0 0.0
    %562 = vmatpush1.msra.mxu0 %v25
    %563 = vmatprep.subr.mxu0 0.0
    %564 = vmatpush1.msra.mxu0 %v26
    %565 = vmatprep.subr.mxu0 0.0
    %566 = vmatpush1.msra.mxu0 %v27
    %567 = vmatprep.subr.mxu0 0.0
    %568 = vmatpush1.msra.mxu0 %v28
    %569 = vmatprep.subr.mxu0 0.0
    %570 = vmatpush1.msra.mxu0 0.0
    %571 = vmatprep.subr.mxu0 0.0
    %572 = vmatpush1.msra.mxu0 0.0
    %573 = vmatprep.subr.mxu0 0.0
    %574 = vmatpush1.msra.mxu0 0.0
    %575 = vmatprep.subr.mxu0 0.0
    %576 = vmatpush1.msra.mxu0 0.0
    %577 = vmatprep.subr.mxu0 0.0
    %578 = vmatpush1.msra.mxu0 0.0
    %579 = vmatprep.subr.mxu0 0.0
    %580 = vmatpush1.msra.mxu0 0.0
    %581 = vmatprep.subr.mxu0 0.0
    %582 = vmatpush1.msra.mxu0 0.0
    %583 = vmatprep.subr.mxu0 0.0
    %584 = vmatpush1.msra.mxu0 0.0
    %585 = vmatprep.subr.mxu0 0.0
    %586 = vmatpush1.msra.mxu0 0.0
    %587 = vmatprep.subr.mxu0 0.0
    %588 = vmatpush1.msra.mxu0 0.0
    %589 = vmatprep.subr.mxu0 0.0
    %590 = vmatpush1.msra.mxu0 0.0
    %591 = vmatprep.subr.mxu0 0.0
    %592 = vmatpush1.msra.mxu0 0.0
    %593 = vmatprep.subr.mxu0 0.0
    %594 = vmatpush1.msra.mxu0 0.0
    %595 = vmatprep.subr.mxu0 0.0
    %596 = vmatpush1.msra.mxu0 0.0
    %597 = vmatprep.subr.mxu0 0.0
    %598 = vmatpush1.msra.mxu0 0.0
    %599 = vmatprep.subr.mxu0 0.0
    %600 = vmatpush1.msra.mxu0 0.0
    %601 = vmatprep.subr.mxu0 0.0
    %602 = vmatpush1.msra.mxu0 0.0
    %603 = vmatprep.subr.mxu0 0.0
    %604 = vmatpush1.msra.mxu0 0.0
    %605 = vmatprep.subr.mxu0 0.0
    %606 = vmatpush1.msra.mxu0 0.0
    %607 = vmatprep.subr.mxu0 0.0
    %608 = vmatpush1.msra.mxu0 0.0
    %609 = vmatprep.subr.mxu0 0.0
    %610 = vmatpush1.msra.mxu0 0.0
    %611 = vmatprep.subr.mxu0 0.0
    %612 = vmatpush1.msra.mxu0 0.0
    %613 = vmatprep.subr.mxu0 0.0
    %614 = vmatpush1.msra.mxu0 0.0
    %615 = vmatprep.subr.mxu0 0.0
    %616 = vmatpush1.msra.mxu0 0.0
    %617 = vmatprep.subr.mxu0 0.0
    %618 = vmatpush1.msra.mxu0 0.0
    %619 = vmatprep.subr.mxu0 0.0
    %620 = vmatpush1.msra.mxu0 0.0
    %621 = vmatprep.subr.mxu0 0.0
    %622 = vmatpush1.msra.mxu0 0.0
    %623 = vmatprep.subr.mxu0 0.0
    %624 = vmatpush1.msra.mxu0 0.0
    %625 = vmatprep.mubr.f32.mxu0 0.0
    %626 = vmatmul.mubr.f32.gmra.mrb[0].mxu0 %v559
    %v627 = vpop.f32.mrb[0].mxu0
    %v628 = vadd.f32 0.0, %v627
    %v629 = vpop.f32.mrb[0].mxu0
    %630 = vdwg.mxu0
    %v631 = vadd.f32 %v105, %v628
    %v632 = vtanh.pop %v631
    %v633 = vld [vmem:[%s3] sm:$0xff]
    %v634 = vld [vmem:[%s3 + $0x8] sm:$0xff]
    %v635 = vld [vmem:[%s3 + $0x10] sm:$0xff]
    %v636 = vld [vmem:[%s3 + $0x18] sm:$0xff]
    %v637 = vld [vmem:[%s5] sm:$0x1]
    %v639 = vlaneseq
    %v640 = vshrl.u32 %v639, 7
    %v641 = vsub.s32 0, %v640
    %v642 = vrot.slane %v637, %v641
    %v645 = vsel %vm107, %v632, 0
    %647 = vmatprep.subr.mxu0 0.0
    %648 = vmatpush1.msra.mxu0 %v633
    %649 = vmatprep.subr.mxu0 0.0
    %650 = vmatpush1.msra.mxu0 %v634
    %651 = vmatprep.subr.mxu0 0.0
    %652 = vmatpush1.msra.mxu0 %v635
    %653 = vmatprep.subr.mxu0 0.0
    %654 = vmatpush1.msra.mxu0 %v636
    %655 = vmatprep.subr.mxu0 0.0
    %656 = vmatpush1.msra.mxu0 0.0
    %657 = vmatprep.subr.mxu0 0.0
    %658 = vmatpush1.msra.mxu0 0.0
    %659 = vmatprep.subr.mxu0 0.0
    %660 = vmatpush1.msra.mxu0 0.0
    %661 = vmatprep.subr.mxu0 0.0
    %662 = vmatpush1.msra.mxu0 0.0
    %663 = vmatprep.subr.mxu0 0.0
    %664 = vmatpush1.msra.mxu0 0.0
    %665 = vmatprep.subr.mxu0 0.0
    %666 = vmatpush1.msra.mxu0 0.0
    %667 = vmatprep.subr.mxu0 0.0
    %668 = vmatpush1.msra.mxu0 0.0
    %669 = vmatprep.subr.mxu0 0.0
    %670 = vmatpush1.msra.mxu0 0.0
    %671 = vmatprep.subr.mxu0 0.0
    %672 = vmatpush1.msra.mxu0 0.0
    %673 = vmatprep.subr.mxu0 0.0
    %674 = vmatpush1.msra.mxu0 0.0
    %675 = vmatprep.subr.mxu0 0.0
    %676 = vmatpush1.msra.mxu0 0.0
    %677 = vmatprep.subr.mxu0 0.0
    %678 = vmatpush1.msra.mxu0 0.0
    %679 = vmatprep.subr.mxu0 0.0
    %680 = vmatpush1.msra.mxu0 0.0
    %681 = vmatprep.subr.mxu0 0.0
    %682 = vmatpush1.msra.mxu0 0.0
    %683 = vmatprep.subr.mxu0 0.0
    %684 = vmatpush1.msra.mxu0 0.0
    %685 = vmatprep.subr.mxu0 0.0
    %686 = vmatpush1.msra.mxu0 0.0
    %687 = vmatprep.subr.mxu0 0.0
    %688 = vmatpush1.msra.mxu0 0.0
    %689 = vmatprep.subr.mxu0 0.0
    %690 = vmatpush1.msra.mxu0 0.0
    %691 = vmatprep.subr.mxu0 0.0
    %692 = vmatpush1.msra.mxu0 0.0
    %693 = vmatprep.subr.mxu0 0.0
    %694 = vmatpush1.msra.mxu0 0.0
    %695 = vmatprep.subr.mxu0 0.0
    %696 = vmatpush1.msra.mxu0 0.0
    %697 = vmatprep.subr.mxu0 0.0
    %698 = vmatpush1.msra.mxu0 0.0
    %699 = vmatprep.subr.mxu0 0.0
    %700 = vmatpush1.msra.mxu0 0.0
    %701 = vmatprep.subr.mxu0 0.0
    %702 = vmatpush1.msra.mxu0 0.0
    %703 = vmatprep.subr.mxu0 0.0
    %704 = vmatpush1.msra.mxu0 0.0
    %705 = vmatprep.subr.mxu0 0.0
    %706 = vmatpush1.msra.mxu0 0.0
    %707 = vmatprep.subr.mxu0 0.0
    %708 = vmatpush1.msra.mxu0 0.0
    %709 = vmatprep.subr.mxu0 0.0
    %710 = vmatpush1.msra.mxu0 0.0
    %711 = vmatprep.mubr.f32.mxu0 0.0
    %712 = vmatmul.mubr.f32.gmra.mrb[0].mxu0 %v645
    %v713 = vpop.f32.mrb[0].mxu0
    %v714 = vadd.f32 %v642, %v713
    %v715 = vpop.f32.mrb[0].mxu0
    %716 = vdwg.mxu0
    %vm717 = vcmask 80896
    %718 = vst.msk [vmem:[#allocation2] sm:$0xff] %vm717, %v714
    // Predicated region
    $region26: #{tpu_custom_call.1} parent=1 // pred_check
      _
    $region27: #{tpu_custom_call.1} parent=1 // pred_check_branch
      %720 = sbr.rel (0) target = $region29
    $region28: #{tpu_custom_call.1} parent=1 // pred_region
      %s722 = ssub.s32 128, 128
      %723 = vsyncadd [#allocation3], %s722
      %s725 = sshll.u32 [#allocation2], 4
      %s726 = int_to_ptr.vmem [resolvable:$true] %s725
      %728 = dma.vmem_to_hbm [thread:$0]  %s726, 128, %s6, [#allocation3]
    $region29: #{tpu_custom_call.1} parent=1 // pred_fallthru
      _
    // Predicated region
    $region30: #{tpu_custom_call.1} parent=1 // pred_check
      _
    $region31: #{tpu_custom_call.1} parent=1 // pred_check_branch
      %730 = sbr.rel (0) target = $region33
    $region32: #{tpu_custom_call.1} parent=1 // pred_region
      %731 = dma.done [#allocation3], 128
    $region33: #{tpu_custom_call.1} parent=1 // pred_fallthru
      _
    %732 = vsyncpa [#allocation3], 1

</llo_original>
